<compile_context>
chip_gen: v7x
topology: tpu7x:2x2x1
jax: 0.10.0
libtpu: 0.0.40
codegen_flags: <defaults>
</compile_context>

<pallas_src>
import jax
import jax.numpy as jnp
from jax import lax
from jax.experimental import pallas as pl
from jax.experimental.pallas import tpu as pltpu

# ---- module hyper-parameters (from the PyTorch source) ----
SESSION_SIZE = 500
D_H1 = 256
D_H2 = 128
D_H3 = 64
N_CLASS = 5          # len(pkdata['label'].unique()) in the original; fixed deterministically here

K_PAD = 512          # 500 -> 512 padded contraction dim for the first matmul
HEAD_PAD = 128       # fused adv(1) + aux(N_CLASS) head padded to a lane-dense 128

NEG_SLOPE = 0.2


def _leaky_relu(x, slope=NEG_SLOPE):
    return jnp.where(x > 0, x, slope * x)


def _round_up(n, m):
    return ((n + m - 1) // m) * m


def discriminator_kernel(x_ref, w1_ref, b1_ref, w2_ref, b2_ref,
                         w3_ref, b3_ref, wh_ref, bh_ref, out_ref):
    # Linear(512(pad of 500) -> 256) + LeakyReLU(0.2); bf16 MXU, f32 accumulate.
    h = jnp.dot(x_ref[...], w1_ref[...], preferred_element_type=jnp.float32)
    h = _leaky_relu(h + b1_ref[...])

    # Linear(256 -> 128) + LeakyReLU(0.2)
    h = jnp.dot(h.astype(jnp.bfloat16), w2_ref[...],
                preferred_element_type=jnp.float32)
    h = _leaky_relu(h + b2_ref[...])

    # Linear(128 -> 64) + LeakyReLU(0.2)
    h = jnp.dot(h.astype(jnp.bfloat16), w3_ref[...],
                preferred_element_type=jnp.float32)
    h = _leaky_relu(h + b3_ref[...])

    # Fused heads: one (64, 128) matmul.
    #   column 0           -> adversarial logit (Sigmoid)
    #   columns 1..N_CLASS -> class logits      (Softmax over those columns)
    logits = jnp.dot(h.astype(jnp.bfloat16), wh_ref[...],
                     preferred_element_type=jnp.float32) + bh_ref[...]

    lane = lax.broadcasted_iota(jnp.int32, logits.shape, 1)
    aux_mask = (lane >= 1) & (lane <= N_CLASS)

    # masked softmax over the N_CLASS aux columns (padding lanes -> 0)
    masked = jnp.where(aux_mask, logits, -1e30)
    m = jnp.max(masked, axis=-1, keepdims=True)
    e = jnp.exp(masked - m)
    s = jnp.sum(e, axis=-1, keepdims=True)
    aux = e / s

    validity = jax.nn.sigmoid(logits)
    out_ref[...] = jnp.where(lane == 0, validity, aux).astype(out_ref.dtype)


def _prepare_kernel_params(params):
    """Pad / fuse / cast PyTorch-layout (in, out) f32 params for the kernel."""
    f32 = jnp.float32
    # zero-pad the 500 input rows of W1 up to 512 (zero rows contribute nothing)
    w1 = jnp.zeros((K_PAD, D_H1), f32).at[:SESSION_SIZE, :].set(params["w1"])
    w1 = w1.astype(jnp.bfloat16)
    w2 = params["w2"].astype(jnp.bfloat16)
    w3 = params["w3"].astype(jnp.bfloat16)
    # fuse adv (64->1) and aux (64->5) heads into one lane-dense (64, 128) matmul
    wh = jnp.zeros((D_H3, HEAD_PAD), f32)
    wh = wh.at[:, 0:1].set(params["w_adv"]).at[:, 1:1 + N_CLASS].set(params["w_aux"])
    wh = wh.astype(jnp.bfloat16)
    bh = jnp.zeros((1, HEAD_PAD), f32)
    bh = bh.at[:, 0:1].set(params["b_adv"]).at[:, 1:1 + N_CLASS].set(params["b_aux"])
    # biases stay f32 (added to the f32 accumulators)
    return (w1, params["b1"], w2, params["b2"], w3, params["b3"], wh, bh)


def discriminator_forward(session, params, *, tb=256):
    """session: (B, 500) f32. Returns (validity (B,1), label (B,N_CLASS)).

    tb: batch tile. 256 matches the 2x256 MXU on v6e/v7x; use 128 on v5e.
    """
    B = session.shape[0]
    b8 = _round_up(max(B, 1), 8)
    TB = min(b8, tb)
    B_pad = _round_up(b8, TB)

    # zero-pad batch to a multiple of TB and features 500 -> 512, cast to bf16
    x = jnp.zeros((B_pad, K_PAD), jnp.float32)
    x = x.at[:B, :SESSION_SIZE].set(session.astype(jnp.float32))
    x = x.astype(jnp.bfloat16)

    w1, b1, w2, b2, w3, b3, wh, bh = _prepare_kernel_params(params)

    const = lambda i: (0, 0)          # weights/biases: resident in VMEM
    in_specs = [
        pl.BlockSpec((TB, K_PAD), lambda i: (i, 0)),   # activations: tiled over batch
        pl.BlockSpec((K_PAD, D_H1), const),
        pl.BlockSpec((1, D_H1), const),
        pl.BlockSpec((D_H1, D_H2), const),
        pl.BlockSpec((1, D_H2), const),
        pl.BlockSpec((D_H2, D_H3), const),
        pl.BlockSpec((1, D_H3), const),
        pl.BlockSpec((D_H3, HEAD_PAD), const),
        pl.BlockSpec((1, HEAD_PAD), const),
    ]

    out = pl.pallas_call(
        discriminator_kernel,
        out_shape=jax.ShapeDtypeStruct((B_pad, HEAD_PAD), jnp.float32),
        grid=(B_pad // TB,),
        in_specs=in_specs,
        out_specs=pl.BlockSpec((TB, HEAD_PAD), lambda i: (i, 0)),
        compiler_params=pltpu.CompilerParams(
            dimension_semantics=("parallel",)),
    )(x, w1, b1, w2, b2, w3, b3, wh, bh)

    validity = out[:B, 0:1]
    label = out[:B, 1:1 + N_CLASS]
    return validity, label


def init_params(key):
    ks = jax.random.split(key, 10)
    s = 0.05
    f32 = jnp.float32
    return {
        "w1": s * jax.random.normal(ks[0], (SESSION_SIZE, D_H1), f32),
        "b1": s * jax.random.normal(ks[1], (1, D_H1), f32),
        "w2": s * jax.random.normal(ks[2], (D_H1, D_H2), f32),
        "b2": s * jax.random.normal(ks[3], (1, D_H2), f32),
        "w3": s * jax.random.normal(ks[4], (D_H2, D_H3), f32),
        "b3": s * jax.random.normal(ks[5], (1, D_H3), f32),
        "w_adv": s * jax.random.normal(ks[6], (D_H3, 1), f32),
        "b_adv": s * jax.random.normal(ks[7], (1, 1), f32),
        "w_aux": s * jax.random.normal(ks[8], (D_H3, N_CLASS), f32),
        "b_aux": s * jax.random.normal(ks[9], (1, N_CLASS), f32),
    }


def _reference(session, params):
    """Pure-JAX mirror of the kernel's numeric path (bf16 matmuls, f32 accum)."""
    x = session.astype(jnp.bfloat16)
    h = jnp.dot(x, params["w1"].astype(jnp.bfloat16),
                preferred_element_type=jnp.float32) + params["b1"]
    h = _leaky_relu(h)
    h = jnp.dot(h.astype(jnp.bfloat16), params["w2"].astype(jnp.bfloat16),
                preferred_element_type=jnp.float32) + params["b2"]
    h = _leaky_relu(h)
    h = jnp.dot(h.astype(jnp.bfloat16), params["w3"].astype(jnp.bfloat16),
                preferred_element_type=jnp.float32) + params["b3"]
    h = _leaky_relu(h)
    hb = h.astype(jnp.bfloat16)
    adv = jnp.dot(hb, params["w_adv"].astype(jnp.bfloat16),
                  preferred_element_type=jnp.float32) + params["b_adv"]
    validity = jax.nn.sigmoid(adv)
    aux = jnp.dot(hb, params["w_aux"].astype(jnp.bfloat16),
                  preferred_element_type=jnp.float32) + params["b_aux"]
    label = jax.nn.softmax(aux, axis=-1)   # nn.Softmax() on 2D -> dim=1
    return validity, label


if __name__ == "__main__":
    key = jax.random.PRNGKey(0)
    k_param, k_x = jax.random.split(key)

    B = 8
    params = init_params(k_param)
    session = jax.random.normal(k_x, (B, SESSION_SIZE), jnp.float32)

    validity, label = discriminator_forward(session, params)
    validity, label = jax.block_until_ready((validity, label))

    ref_v, ref_l = _reference(session, params)
    assert validity.shape == (B, 1), validity.shape
    assert label.shape == (B, N_CLASS), label.shape
    assert jnp.allclose(validity, ref_v, atol=2e-3, rtol=2e-3), "validity mismatch"
    assert jnp.allclose(label, ref_l, atol=2e-3, rtol=2e-3), "label mismatch"
    assert jnp.allclose(jnp.sum(label, axis=-1), 1.0, atol=1e-3), "softmax not normalized"

    print("KERNEL_OK")
</pallas_src>

<mosaic_0001>
module attributes {stable_mosaic.version = 11 : i64} {
  func.func @discriminator_kernel(%arg0: i32, %arg1: memref<8x512xbf16, #tpu.memory_space<vmem>>, %arg2: memref<512x256xbf16, #tpu.memory_space<vmem>>, %arg3: memref<1x256xf32, #tpu.memory_space<vmem>>, %arg4: memref<256x128xbf16, #tpu.memory_space<vmem>>, %arg5: memref<1x128xf32, #tpu.memory_space<vmem>>, %arg6: memref<128x64xbf16, #tpu.memory_space<vmem>>, %arg7: memref<1x64xf32, #tpu.memory_space<vmem>>, %arg8: memref<64x128xbf16, #tpu.memory_space<vmem>>, %arg9: memref<1x128xf32, #tpu.memory_space<vmem>>, %arg10: memref<8x128xf32, #tpu.memory_space<vmem>>) attributes {dimension_semantics = [#tpu.dimension_semantics<parallel>], iteration_bounds = array<i64: 1>, scalar_prefetch = 0 : i64, scratch_operands = 0 : i64, tpu.core_type = #tpu.core_type<tc>, window_params = [{transform_indices = @transform_0, window_bounds = array<i64: 8, 512>}, {pipeline_mode = #tpu.pipeline_mode<synchronous>, transform_indices = @transform_1, window_bounds = array<i64: 512, 256>}, {pipeline_mode = #tpu.pipeline_mode<synchronous>, transform_indices = @transform_2, window_bounds = array<i64: 1, 256>}, {pipeline_mode = #tpu.pipeline_mode<synchronous>, transform_indices = @transform_3, window_bounds = array<i64: 256, 128>}, {pipeline_mode = #tpu.pipeline_mode<synchronous>, transform_indices = @transform_4, window_bounds = array<i64: 1, 128>}, {pipeline_mode = #tpu.pipeline_mode<synchronous>, transform_indices = @transform_5, window_bounds = array<i64: 128, 64>}, {pipeline_mode = #tpu.pipeline_mode<synchronous>, transform_indices = @transform_6, window_bounds = array<i64: 1, 64>}, {pipeline_mode = #tpu.pipeline_mode<synchronous>, transform_indices = @transform_7, window_bounds = array<i64: 64, 128>}, {pipeline_mode = #tpu.pipeline_mode<synchronous>, transform_indices = @transform_8, window_bounds = array<i64: 1, 128>}, {transform_indices = @transform_9, window_bounds = array<i64: 8, 128>}]} {
    %c0 = arith.constant 0 : index
    %c0_0 = arith.constant 0 : index
    %0 = vector.load %arg1[%c0, %c0_0] : memref<8x512xbf16, #tpu.memory_space<vmem>>, vector<8x512xbf16>
    %c0_1 = arith.constant 0 : index
    %c0_2 = arith.constant 0 : index
    %1 = vector.load %arg2[%c0_1, %c0_2] : memref<512x256xbf16, #tpu.memory_space<vmem>>, vector<512x256xbf16>
    %cst = arith.constant dense<0.000000e+00> : vector<8x256xf32>
    %2 = tpu.matmul %0, %1, %cst {dimension_numbers = #tpu.dot_dimension_numbers<[1], [0], [0], [1], [0, 0, 1, 1], [], []>} : vector<8x512xbf16>, vector<512x256xbf16>, vector<8x256xf32> -> vector<8x256xf32>
    %c0_3 = arith.constant 0 : index
    %c0_4 = arith.constant 0 : index
    %3 = vector.load %arg3[%c0_3, %c0_4] : memref<1x256xf32, #tpu.memory_space<vmem>>, vector<1x256xf32>
    %4 = vector.broadcast %3 : vector<1x256xf32> to vector<8x256xf32>
    %5 = arith.addf %2, %4 : vector<8x256xf32>
    %cst_5 = arith.constant 0.000000e+00 : f32
    %6 = vector.broadcast %cst_5 : f32 to vector<8x256xf32>
    %7 = arith.cmpf ogt, %5, %6 : vector<8x256xf32>
    %cst_6 = arith.constant 2.000000e-01 : f32
    %8 = vector.broadcast %cst_6 : f32 to vector<8x256xf32>
    %9 = arith.mulf %8, %5 : vector<8x256xf32>
    %10 = arith.select %7, %5, %9 : vector<8x256xi1>, vector<8x256xf32>
    %11 = arith.truncf %10 : vector<8x256xf32> to vector<8x256xbf16>
    %c0_7 = arith.constant 0 : index
    %c0_8 = arith.constant 0 : index
    %12 = vector.load %arg4[%c0_7, %c0_8] : memref<256x128xbf16, #tpu.memory_space<vmem>>, vector<256x128xbf16>
    %cst_9 = arith.constant dense<0.000000e+00> : vector<8x128xf32>
    %13 = tpu.matmul %11, %12, %cst_9 {dimension_numbers = #tpu.dot_dimension_numbers<[1], [0], [0], [1], [0, 0, 1, 1], [], []>} : vector<8x256xbf16>, vector<256x128xbf16>, vector<8x128xf32> -> vector<8x128xf32>
    %c0_10 = arith.constant 0 : index
    %c0_11 = arith.constant 0 : index
    %14 = vector.load %arg5[%c0_10, %c0_11] : memref<1x128xf32, #tpu.memory_space<vmem>>, vector<1x128xf32>
    %15 = vector.broadcast %14 : vector<1x128xf32> to vector<8x128xf32>
    %16 = arith.addf %13, %15 : vector<8x128xf32>
    %cst_12 = arith.constant 0.000000e+00 : f32
    %17 = vector.broadcast %cst_12 : f32 to vector<8x128xf32>
    %18 = arith.cmpf ogt, %16, %17 : vector<8x128xf32>
    %cst_13 = arith.constant 2.000000e-01 : f32
    %19 = vector.broadcast %cst_13 : f32 to vector<8x128xf32>
    %20 = arith.mulf %19, %16 : vector<8x128xf32>
    %21 = arith.select %18, %16, %20 : vector<8x128xi1>, vector<8x128xf32>
    %22 = arith.truncf %21 : vector<8x128xf32> to vector<8x128xbf16>
    %c0_14 = arith.constant 0 : index
    %c0_15 = arith.constant 0 : index
    %23 = vector.load %arg6[%c0_14, %c0_15] : memref<128x64xbf16, #tpu.memory_space<vmem>>, vector<128x64xbf16>
    %cst_16 = arith.constant dense<0.000000e+00> : vector<8x64xf32>
    %24 = tpu.matmul %22, %23, %cst_16 {dimension_numbers = #tpu.dot_dimension_numbers<[1], [0], [0], [1], [0, 0, 1, 1], [], []>} : vector<8x128xbf16>, vector<128x64xbf16>, vector<8x64xf32> -> vector<8x64xf32>
    %c0_17 = arith.constant 0 : index
    %c0_18 = arith.constant 0 : index
    %25 = vector.load %arg7[%c0_17, %c0_18] : memref<1x64xf32, #tpu.memory_space<vmem>>, vector<1x64xf32>
    %26 = vector.broadcast %25 : vector<1x64xf32> to vector<8x64xf32>
    %27 = arith.addf %24, %26 : vector<8x64xf32>
    %cst_19 = arith.constant 0.000000e+00 : f32
    %28 = vector.broadcast %cst_19 : f32 to vector<8x64xf32>
    %29 = arith.cmpf ogt, %27, %28 : vector<8x64xf32>
    %cst_20 = arith.constant 2.000000e-01 : f32
    %30 = vector.broadcast %cst_20 : f32 to vector<8x64xf32>
    %31 = arith.mulf %30, %27 : vector<8x64xf32>
    %32 = arith.select %29, %27, %31 : vector<8x64xi1>, vector<8x64xf32>
    %33 = arith.truncf %32 : vector<8x64xf32> to vector<8x64xbf16>
    %c0_21 = arith.constant 0 : index
    %c0_22 = arith.constant 0 : index
    %34 = vector.load %arg8[%c0_21, %c0_22] : memref<64x128xbf16, #tpu.memory_space<vmem>>, vector<64x128xbf16>
    %cst_23 = arith.constant dense<0.000000e+00> : vector<8x128xf32>
    %35 = tpu.matmul %33, %34, %cst_23 {dimension_numbers = #tpu.dot_dimension_numbers<[1], [0], [0], [1], [0, 0, 1, 1], [], []>} : vector<8x64xbf16>, vector<64x128xbf16>, vector<8x128xf32> -> vector<8x128xf32>
    %c0_24 = arith.constant 0 : index
    %c0_25 = arith.constant 0 : index
    %36 = vector.load %arg9[%c0_24, %c0_25] : memref<1x128xf32, #tpu.memory_space<vmem>>, vector<1x128xf32>
    %37 = vector.broadcast %36 : vector<1x128xf32> to vector<8x128xf32>
    %38 = arith.addf %35, %37 : vector<8x128xf32>
    %39 = tpu.iota {dimensions = array<i32: 1>} : vector<8x128xi32>
    %c1_i32 = arith.constant 1 : i32
    %40 = vector.broadcast %c1_i32 : i32 to vector<8x128xi32>
    %41 = arith.cmpi sge, %39, %40 : vector<8x128xi32>
    %c5_i32 = arith.constant 5 : i32
    %42 = vector.broadcast %c5_i32 : i32 to vector<8x128xi32>
    %43 = arith.cmpi sle, %39, %42 : vector<8x128xi32>
    %44 = arith.andi %41, %43 : vector<8x128xi1>
    %cst_26 = arith.constant -1.000000e+30 : f32
    %45 = vector.broadcast %cst_26 : f32 to vector<8x128xf32>
    %46 = arith.select %44, %38, %45 : vector<8x128xi1>, vector<8x128xf32>
    %cst_27 = arith.constant dense<0xFF800000> : vector<8xf32>
    %47 = vector.multi_reduction <maximumf>, %46, %cst_27 [1] : vector<8x128xf32> to vector<8xf32>
    %48 = vector.shape_cast %47 : vector<8xf32> to vector<8x1xf32>
    %49 = vector.broadcast %48 : vector<8x1xf32> to vector<8x128xf32>
    %50 = arith.subf %46, %49 : vector<8x128xf32>
    %51 = math.exp %50 : vector<8x128xf32>
    %cst_28 = arith.constant dense<0.000000e+00> : vector<8xf32>
    %52 = vector.multi_reduction <add>, %51, %cst_28 [1] : vector<8x128xf32> to vector<8xf32>
    %53 = vector.shape_cast %52 : vector<8xf32> to vector<8x1xf32>
    %54 = vector.broadcast %53 : vector<8x1xf32> to vector<8x128xf32>
    %55 = arith.divf %51, %54 : vector<8x128xf32>
    %56 = arith.negf %38 : vector<8x128xf32>
    %57 = math.exp %56 : vector<8x128xf32>
    %cst_29 = arith.constant 1.000000e+00 : f32
    %58 = vector.broadcast %cst_29 : f32 to vector<8x128xf32>
    %59 = arith.addf %58, %57 : vector<8x128xf32>
    %60 = arith.divf %58, %59 : vector<8x128xf32>
    %c0_i32 = arith.constant 0 : i32
    %61 = vector.broadcast %c0_i32 : i32 to vector<8x128xi32>
    %62 = arith.cmpi eq, %39, %61 : vector<8x128xi32>
    %63 = arith.select %62, %60, %55 : vector<8x128xi1>, vector<8x128xf32>
    %c0_30 = arith.constant 0 : index
    %c0_31 = arith.constant 0 : index
    %64 = vector.load %arg10[%c0_30, %c0_31] : memref<8x128xf32, #tpu.memory_space<vmem>>, vector<8x128xf32>
    tpu.vector_store %arg10[%c0_30, %c0_31], %63 {strides = array<i32>} : memref<8x128xf32, #tpu.memory_space<vmem>>, vector<8x128xf32>,
    return
  }
  func.func @transform_0(%arg0: i32) -> (i32, i32) {
    %c0_i32 = arith.constant 0 : i32
    %c0_i32_0 = arith.constant 0 : i32
    return %arg0, %c0_i32 : i32, i32
  }
  func.func @transform_1(%arg0: i32) -> (i32, i32) {
    %c0_i32 = arith.constant 0 : i32
    %c0_i32_0 = arith.constant 0 : i32
    %c0_i32_1 = arith.constant 0 : i32
    return %c0_i32, %c0_i32_0 : i32, i32
  }
  func.func @transform_2(%arg0: i32) -> (i32, i32) {
    %c0_i32 = arith.constant 0 : i32
    %c0_i32_0 = arith.constant 0 : i32
    %c0_i32_1 = arith.constant 0 : i32
    return %c0_i32, %c0_i32_0 : i32, i32
  }
  func.func @transform_3(%arg0: i32) -> (i32, i32) {
    %c0_i32 = arith.constant 0 : i32
    %c0_i32_0 = arith.constant 0 : i32
    %c0_i32_1 = arith.constant 0 : i32
    return %c0_i32, %c0_i32_0 : i32, i32
  }
  func.func @transform_4(%arg0: i32) -> (i32, i32) {
    %c0_i32 = arith.constant 0 : i32
    %c0_i32_0 = arith.constant 0 : i32
    %c0_i32_1 = arith.constant 0 : i32
    return %c0_i32, %c0_i32_0 : i32, i32
  }
  func.func @transform_5(%arg0: i32) -> (i32, i32) {
    %c0_i32 = arith.constant 0 : i32
    %c0_i32_0 = arith.constant 0 : i32
    %c0_i32_1 = arith.constant 0 : i32
    return %c0_i32, %c0_i32_0 : i32, i32
  }
  func.func @transform_6(%arg0: i32) -> (i32, i32) {
    %c0_i32 = arith.constant 0 : i32
    %c0_i32_0 = arith.constant 0 : i32
    %c0_i32_1 = arith.constant 0 : i32
    return %c0_i32, %c0_i32_0 : i32, i32
  }
  func.func @transform_7(%arg0: i32) -> (i32, i32) {
    %c0_i32 = arith.constant 0 : i32
    %c0_i32_0 = arith.constant 0 : i32
    %c0_i32_1 = arith.constant 0 : i32
    return %c0_i32, %c0_i32_0 : i32, i32
  }
  func.func @transform_8(%arg0: i32) -> (i32, i32) {
    %c0_i32 = arith.constant 0 : i32
    %c0_i32_0 = arith.constant 0 : i32
    %c0_i32_1 = arith.constant 0 : i32
    return %c0_i32, %c0_i32_0 : i32, i32
  }
  func.func @transform_9(%arg0: i32) -> (i32, i32) {
    %c0_i32 = arith.constant 0 : i32
    %c0_i32_0 = arith.constant 0 : i32
    return %arg0, %c0_i32 : i32, i32
  }
}

</mosaic_0001>

<llo_original>
// kernel: tpu_custom_call.1
$region0: #{tpu_custom_call.1}
  #allocation0 [shape = 'u32[]', space=smem, size = 0x4, offset = 0x4, fixed_abs, tag = 'smem constant byte address 0x4 - core index']
  #allocation1 [shape = 'u32[144,128]{1,0:T(1,128)}', space=vmem, size = 0x12000, scoped, tag = 'internal scratch']
  %s0 = inlined_call_operand.vmem [shape: bf16[8,512], index: 0, kind: input, shape index: {}]
  %s1 = inlined_call_operand.hbm [shape: bf16[512,256], index: 1, kind: input, shape index: {}]
  %s2 = inlined_call_operand.vmem [shape: f32[1,256], index: 2, kind: input, shape index: {}]
  %s3 = inlined_call_operand.hbm [shape: bf16[256,128], index: 3, kind: input, shape index: {}]
  %s4 = inlined_call_operand.vmem [shape: f32[1,128], index: 4, kind: input, shape index: {}]
  %s5 = inlined_call_operand.vmem [shape: bf16[128,64], index: 5, kind: input, shape index: {}]
  %s6 = inlined_call_operand.vmem [shape: f32[1,64], index: 6, kind: input, shape index: {}]
  %s7 = inlined_call_operand.vmem [shape: bf16[64,128], index: 7, kind: input, shape index: {}]
  %s8 = inlined_call_operand.vmem [shape: f32[1,128], index: 8, kind: input, shape index: {}]
  %s9 = inlined_call_operand.hbm [shape: f32[8,128], index: 9, kind: output, shape index: {}]
  %s10 = sld [smem:[#allocation0]]
  $region54: #{tpu_custom_call.1} parent=0
    _
  %s12 = ssub.s32 1, %s10
  %s13 = scalar_select 0, %s12, %s10
  $region1: #{tpu_custom_call.1} parent=0
    #allocation2 [shape = 'u8[262144]{0}', space=vmem, size = 0x40000, scoped, tag = 'input window, operand 1, single buffered']
    #allocation3 [shape = 's32[1]{0}', space=sflag, size = 0x4, scoped, tag = 'scoped memory for tpu_custom_call.1']
    #allocation4 [shape = 's32[1]{0}', space=sflag, size = 0x4, scoped, tag = 'scoped memory for tpu_custom_call.1']
    #allocation5 [shape = 'u8[65536]{0}', space=vmem, size = 0x10000, scoped, tag = 'input window, operand 3, single buffered']
    #allocation6 [shape = 's32[1]{0}', space=sflag, size = 0x4, scoped, tag = 'scoped memory for tpu_custom_call.1']
    #allocation7 [shape = 'u8[4096]{0}', space=vmem, size = 0x1000, scoped, tag = 'output window, operand 0, single buffered']
    %14 = vsyncpa [#allocation3], 0
    %15 = vsyncpa [#allocation6], 0
    %16 = vsyncpa [#allocation4], 0
    // Predicated region
    $region2: #{tpu_custom_call.1} parent=1 // pred_check
      _
    $region3: #{tpu_custom_call.1} parent=1 // pred_check_branch
      %18 = sbr.rel (0) target = $region5
    $region4: #{tpu_custom_call.1} parent=1 // pred_region
      _
    $region5: #{tpu_custom_call.1} parent=1 // pred_fallthru
      _
    // Predicated region
    $region6: #{tpu_custom_call.1} parent=1 // pred_check
      _
    $region7: #{tpu_custom_call.1} parent=1 // pred_check_branch
      %20 = sbr.rel (0) target = $region9
    $region8: #{tpu_custom_call.1} parent=1 // pred_region
      %s22 = ssub.s32 8192, 8192
      %23 = vsyncadd [#allocation3], %s22
      %s24 = sshll.u32 [#allocation2], 4
      %s25 = int_to_ptr.vmem [resolvable:$true] %s24
      %30 = dma.hbm_to_vmem [thread:$0]  %s1, 8192, %s25, [#allocation3], 128, 128, 8
    $region9: #{tpu_custom_call.1} parent=1 // pred_fallthru
      _
    // Predicated region
    $region10: #{tpu_custom_call.1} parent=1 // pred_check
      _
    $region11: #{tpu_custom_call.1} parent=1 // pred_check_branch
      %32 = sbr.rel (0) target = $region13
    $region12: #{tpu_custom_call.1} parent=1 // pred_region
      _
    $region13: #{tpu_custom_call.1} parent=1 // pred_fallthru
      _
    // Predicated region
    $region14: #{tpu_custom_call.1} parent=1 // pred_check
      _
    $region15: #{tpu_custom_call.1} parent=1 // pred_check_branch
      %34 = sbr.rel (0) target = $region17
    $region16: #{tpu_custom_call.1} parent=1 // pred_region
      %s36 = ssub.s32 2048, 2048
      %37 = vsyncadd [#allocation6], %s36
      %s38 = sshll.u32 [#allocation5], 4
      %s39 = int_to_ptr.vmem [resolvable:$true] %s38
      %44 = dma.hbm_to_vmem [thread:$0]  %s3, 2048, %s39, [#allocation6], 64, 64, 4
    $region17: #{tpu_custom_call.1} parent=1 // pred_fallthru
      _
    // Predicated region
    $region18: #{tpu_custom_call.1} parent=1 // pred_check
      _
    $region19: #{tpu_custom_call.1} parent=1 // pred_check_branch
      %46 = sbr.rel (0) target = $region21
    $region20: #{tpu_custom_call.1} parent=1 // pred_region
      _
    $region21: #{tpu_custom_call.1} parent=1 // pred_fallthru
      _
    // Predicated region
    $region22: #{tpu_custom_call.1} parent=1 // pred_check
      _
    $region23: #{tpu_custom_call.1} parent=1 // pred_check_branch
      %48 = sbr.rel (0) target = $region25
    $region24: #{tpu_custom_call.1} parent=1 // pred_region
      _
    $region25: #{tpu_custom_call.1} parent=1 // pred_fallthru
      _
    // Predicated region
    $region26: #{tpu_custom_call.1} parent=1 // pred_check
      _
    $region27: #{tpu_custom_call.1} parent=1 // pred_check_branch
      %50 = sbr.rel (0) target = $region29
    $region28: #{tpu_custom_call.1} parent=1 // pred_region
      _
    $region29: #{tpu_custom_call.1} parent=1 // pred_fallthru
      _
    // Predicated region
    $region30: #{tpu_custom_call.1} parent=1 // pred_check
      _
    $region31: #{tpu_custom_call.1} parent=1 // pred_check_branch
      %52 = sbr.rel (0) target = $region33
    $region32: #{tpu_custom_call.1} parent=1 // pred_region
      _
    $region33: #{tpu_custom_call.1} parent=1 // pred_fallthru
      _
    // Predicated region
    $region34: #{tpu_custom_call.1} parent=1 // pred_check
      _
    $region35: #{tpu_custom_call.1} parent=1 // pred_check_branch
      %54 = sbr.rel (0) target = $region37
    $region36: #{tpu_custom_call.1} parent=1 // pred_region
      _
    $region37: #{tpu_custom_call.1} parent=1 // pred_fallthru
      _
    // Predicated region
    $region38: #{tpu_custom_call.1} parent=1 // pred_check
      _
    $region39: #{tpu_custom_call.1} parent=1 // pred_check_branch
      %56 = sbr.rel (0) target = $region41
    $region40: #{tpu_custom_call.1} parent=1 // pred_region
      %57 = dma.done [#allocation3], 8192
    $region41: #{tpu_custom_call.1} parent=1 // pred_fallthru
      _
    // Predicated region
    $region42: #{tpu_custom_call.1} parent=1 // pred_check
      _
    $region43: #{tpu_custom_call.1} parent=1 // pred_check_branch
      %59 = sbr.rel (0) target = $region45
    $region44: #{tpu_custom_call.1} parent=1 // pred_region
      %60 = dma.done [#allocation6], 2048
    $region45: #{tpu_custom_call.1} parent=1 // pred_fallthru
      _
    %v62 = vld [vmem:[%s0] sm:$0xff]
    %v63 = vld [vmem:[%s0 + $0x8] sm:$0xff]
    %v64 = vld [vmem:[#allocation2] sm:$0xff]
    %v65 = vld [vmem:[#allocation2 + $0x8] sm:$0xff]
    %v66 = vld [vmem:[#allocation2 + $0x10] sm:$0xff]
    %v67 = vld [vmem:[#allocation2 + $0x18] sm:$0xff]
    %v68 = vld [vmem:[#allocation2 + $0x20] sm:$0xff]
    %v69 = vld [vmem:[#allocation2 + $0x28] sm:$0xff]
    %v70 = vld [vmem:[#allocation2 + $0x30] sm:$0xff]
    %v71 = vld [vmem:[#allocation2 + $0x38] sm:$0xff]
    %v72 = vld [vmem:[#allocation2 + $0x40] sm:$0xff]
    %v73 = vld [vmem:[#allocation2 + $0x48] sm:$0xff]
    %v74 = vld [vmem:[#allocation2 + $0x50] sm:$0xff]
    %v75 = vld [vmem:[#allocation2 + $0x58] sm:$0xff]
    %v76 = vld [vmem:[#allocation2 + $0x60] sm:$0xff]
    %v77 = vld [vmem:[#allocation2 + $0x68] sm:$0xff]
    %v78 = vld [vmem:[#allocation2 + $0x70] sm:$0xff]
    %v79 = vld [vmem:[#allocation2 + $0x78] sm:$0xff]
    %v80 = vld [vmem:[#allocation2 + $0x80] sm:$0xff]
    %v81 = vld [vmem:[#allocation2 + $0x88] sm:$0xff]
    %v82 = vld [vmem:[#allocation2 + $0x90] sm:$0xff]
    %v83 = vld [vmem:[#allocation2 + $0x98] sm:$0xff]
    %v84 = vld [vmem:[#allocation2 + $0xa0] sm:$0xff]
    %v85 = vld [vmem:[#allocation2 + $0xa8] sm:$0xff]
    %v86 = vld [vmem:[#allocation2 + $0xb0] sm:$0xff]
    %v87 = vld [vmem:[#allocation2 + $0xb8] sm:$0xff]
    %v88 = vld [vmem:[#allocation2 + $0xc0] sm:$0xff]
    %v89 = vld [vmem:[#allocation2 + $0xc8] sm:$0xff]
    %v90 = vld [vmem:[#allocation2 + $0xd0] sm:$0xff]
    %v91 = vld [vmem:[#allocation2 + $0xd8] sm:$0xff]
    %v92 = vld [vmem:[#allocation2 + $0xe0] sm:$0xff]
    %v93 = vld [vmem:[#allocation2 + $0xe8] sm:$0xff]
    %v94 = vld [vmem:[#allocation2 + $0xf0] sm:$0xff]
    %v95 = vld [vmem:[#allocation2 + $0xf8] sm:$0xff]
    %v96 = vld [vmem:[#allocation2 + $0x100] sm:$0xff]
    %v97 = vld [vmem:[#allocation2 + $0x108] sm:$0xff]
    %v98 = vld [vmem:[#allocation2 + $0x110] sm:$0xff]
    %v99 = vld [vmem:[#allocation2 + $0x118] sm:$0xff]
    %v100 = vld [vmem:[#allocation2 + $0x120] sm:$0xff]
    %v101 = vld [vmem:[#allocation2 + $0x128] sm:$0xff]
    %v102 = vld [vmem:[#allocation2 + $0x130] sm:$0xff]
    %v103 = vld [vmem:[#allocation2 + $0x138] sm:$0xff]
    %v104 = vld [vmem:[#allocation2 + $0x140] sm:$0xff]
    %v105 = vld [vmem:[#allocation2 + $0x148] sm:$0xff]
    %v106 = vld [vmem:[#allocation2 + $0x150] sm:$0xff]
    %v107 = vld [vmem:[#allocation2 + $0x158] sm:$0xff]
    %v108 = vld [vmem:[#allocation2 + $0x160] sm:$0xff]
    %v109 = vld [vmem:[#allocation2 + $0x168] sm:$0xff]
    %v110 = vld [vmem:[#allocation2 + $0x170] sm:$0xff]
    %v111 = vld [vmem:[#allocation2 + $0x178] sm:$0xff]
    %v112 = vld [vmem:[#allocation2 + $0x180] sm:$0xff]
    %v113 = vld [vmem:[#allocation2 + $0x188] sm:$0xff]
    %v114 = vld [vmem:[#allocation2 + $0x190] sm:$0xff]
    %v115 = vld [vmem:[#allocation2 + $0x198] sm:$0xff]
    %v116 = vld [vmem:[#allocation2 + $0x1a0] sm:$0xff]
    %v117 = vld [vmem:[#allocation2 + $0x1a8] sm:$0xff]
    %v118 = vld [vmem:[#allocation2 + $0x1b0] sm:$0xff]
    %v119 = vld [vmem:[#allocation2 + $0x1b8] sm:$0xff]
    %v120 = vld [vmem:[#allocation2 + $0x1c0] sm:$0xff]
    %v121 = vld [vmem:[#allocation2 + $0x1c8] sm:$0xff]
    %v122 = vld [vmem:[#allocation2 + $0x1d0] sm:$0xff]
    %v123 = vld [vmem:[#allocation2 + $0x1d8] sm:$0xff]
    %v124 = vld [vmem:[#allocation2 + $0x1e0] sm:$0xff]
    %v125 = vld [vmem:[#allocation2 + $0x1e8] sm:$0xff]
    %v126 = vld [vmem:[#allocation2 + $0x1f0] sm:$0xff]
    %v127 = vld [vmem:[#allocation2 + $0x1f8] sm:$0xff]
    %v128 = vld [vmem:[%s2] sm:$0x3]
    %v130 = vlaneseq
    %v131 = vshrl.u32 %v130, 7
    %v132 = vsub.s32 0, %v131
    %v133 = vrot.slane %v128, %v132
    %v134 = vlaneseq
    %v135 = vshrl.u32 %v134, 7
    %v136 = vsub.s32 1, %v135
    %v137 = vrot.slane %v128, %v136
    %v142 = vunpack.c.l.b16 %v62
    %v143 = vunpack.c.h.b16 %v62
    %v144 = vunpack.c.l.b16 %v63
    %v145 = vunpack.c.h.b16 %v63
    %v146 = vpack.c.b16 %v142, %v142
    %v147 = vpack.c.b16 %v143, %v143
    %v148 = vpack.c.b16 %v144, %v144
    %v149 = vpack.c.b16 %v145, %v145
    %v218 = vunpack.c.l.b16 %v64
    %v219 = vunpack.c.h.b16 %v64
    %v220 = vunpack.c.l.b16 %v65
    %v221 = vunpack.c.h.b16 %v65
    %v222 = vunpack.c.l.b16 %v66
    %v223 = vunpack.c.h.b16 %v66
    %v224 = vunpack.c.l.b16 %v67
    %v225 = vunpack.c.h.b16 %v67
    %v226 = vunpack.c.l.b16 %v68
    %v227 = vunpack.c.h.b16 %v68
    %v228 = vunpack.c.l.b16 %v69
    %v229 = vunpack.c.h.b16 %v69
    %v230 = vunpack.c.l.b16 %v70
    %v231 = vunpack.c.h.b16 %v70
    %v232 = vunpack.c.l.b16 %v71
    %v233 = vunpack.c.h.b16 %v71
    %v234 = vunpack.c.l.b16 %v72
    %v235 = vunpack.c.h.b16 %v72
    %v236 = vunpack.c.l.b16 %v73
    %v237 = vunpack.c.h.b16 %v73
    %v238 = vunpack.c.l.b16 %v74
    %v239 = vunpack.c.h.b16 %v74
    %v240 = vunpack.c.l.b16 %v75
    %v241 = vunpack.c.h.b16 %v75
    %v242 = vunpack.c.l.b16 %v76
    %v243 = vunpack.c.h.b16 %v76
    %v244 = vunpack.c.l.b16 %v77
    %v245 = vunpack.c.h.b16 %v77
    %v246 = vunpack.c.l.b16 %v78
    %v247 = vunpack.c.h.b16 %v78
    %v248 = vunpack.c.l.b16 %v79
    %v249 = vunpack.c.h.b16 %v79
    %v250 = vunpack.c.l.b16 %v80
    %v251 = vunpack.c.h.b16 %v80
    %v252 = vunpack.c.l.b16 %v81
    %v253 = vunpack.c.h.b16 %v81
    %v254 = vunpack.c.l.b16 %v82
    %v255 = vunpack.c.h.b16 %v82
    %v256 = vunpack.c.l.b16 %v83
    %v257 = vunpack.c.h.b16 %v83
    %v258 = vunpack.c.l.b16 %v84
    %v259 = vunpack.c.h.b16 %v84
    %v260 = vunpack.c.l.b16 %v85
    %v261 = vunpack.c.h.b16 %v85
    %v262 = vunpack.c.l.b16 %v86
    %v263 = vunpack.c.h.b16 %v86
    %v264 = vunpack.c.l.b16 %v87
    %v265 = vunpack.c.h.b16 %v87
    %v266 = vunpack.c.l.b16 %v88
    %v267 = vunpack.c.h.b16 %v88
    %v268 = vunpack.c.l.b16 %v89
    %v269 = vunpack.c.h.b16 %v89
    %v270 = vunpack.c.l.b16 %v90
    %v271 = vunpack.c.h.b16 %v90
    %v272 = vunpack.c.l.b16 %v91
    %v273 = vunpack.c.h.b16 %v91
    %v274 = vunpack.c.l.b16 %v92
    %v275 = vunpack.c.h.b16 %v92
    %v276 = vunpack.c.l.b16 %v93
    %v277 = vunpack.c.h.b16 %v93
    %v278 = vunpack.c.l.b16 %v94
    %v279 = vunpack.c.h.b16 %v94
    %v280 = vunpack.c.l.b16 %v95
    %v281 = vunpack.c.h.b16 %v95
    %v282 = vunpack.c.l.b16 %v96
    %v283 = vunpack.c.h.b16 %v96
    %v284 = vunpack.c.l.b16 %v97
    %v285 = vunpack.c.h.b16 %v97
    %v286 = vunpack.c.l.b16 %v98
    %v287 = vunpack.c.h.b16 %v98
    %v288 = vunpack.c.l.b16 %v99
    %v289 = vunpack.c.h.b16 %v99
    %v290 = vunpack.c.l.b16 %v100
    %v291 = vunpack.c.h.b16 %v100
    %v292 = vunpack.c.l.b16 %v101
    %v293 = vunpack.c.h.b16 %v101
    %v294 = vunpack.c.l.b16 %v102
    %v295 = vunpack.c.h.b16 %v102
    %v296 = vunpack.c.l.b16 %v103
    %v297 = vunpack.c.h.b16 %v103
    %v298 = vunpack.c.l.b16 %v104
    %v299 = vunpack.c.h.b16 %v104
    %v300 = vunpack.c.l.b16 %v105
    %v301 = vunpack.c.h.b16 %v105
    %v302 = vunpack.c.l.b16 %v106
    %v303 = vunpack.c.h.b16 %v106
    %v304 = vunpack.c.l.b16 %v107
    %v305 = vunpack.c.h.b16 %v107
    %v306 = vunpack.c.l.b16 %v108
    %v307 = vunpack.c.h.b16 %v108
    %v308 = vunpack.c.l.b16 %v109
    %v309 = vunpack.c.h.b16 %v109
    %v310 = vunpack.c.l.b16 %v110
    %v311 = vunpack.c.h.b16 %v110
    %v312 = vunpack.c.l.b16 %v111
    %v313 = vunpack.c.h.b16 %v111
    %v314 = vunpack.c.l.b16 %v112
    %v315 = vunpack.c.h.b16 %v112
    %v316 = vunpack.c.l.b16 %v113
    %v317 = vunpack.c.h.b16 %v113
    %v318 = vunpack.c.l.b16 %v114
    %v319 = vunpack.c.h.b16 %v114
    %v320 = vunpack.c.l.b16 %v115
    %v321 = vunpack.c.h.b16 %v115
    %v322 = vunpack.c.l.b16 %v116
    %v323 = vunpack.c.h.b16 %v116
    %v324 = vunpack.c.l.b16 %v117
    %v325 = vunpack.c.h.b16 %v117
    %v326 = vunpack.c.l.b16 %v118
    %v327 = vunpack.c.h.b16 %v118
    %v328 = vunpack.c.l.b16 %v119
    %v329 = vunpack.c.h.b16 %v119
    %v330 = vunpack.c.l.b16 %v120
    %v331 = vunpack.c.h.b16 %v120
    %v332 = vunpack.c.l.b16 %v121
    %v333 = vunpack.c.h.b16 %v121
    %v334 = vunpack.c.l.b16 %v122
    %v335 = vunpack.c.h.b16 %v122
    %v336 = vunpack.c.l.b16 %v123
    %v337 = vunpack.c.h.b16 %v123
    %v338 = vunpack.c.l.b16 %v124
    %v339 = vunpack.c.h.b16 %v124
    %v340 = vunpack.c.l.b16 %v125
    %v341 = vunpack.c.h.b16 %v125
    %v342 = vunpack.c.l.b16 %v126
    %v343 = vunpack.c.h.b16 %v126
    %v344 = vunpack.c.l.b16 %v127
    %v345 = vunpack.c.h.b16 %v127
    %v346 = vpack.c.b16 %v220, %v218
    %v347 = vpack.c.b16 %v221, %v219
    %v348 = vpack.c.b16 %v224, %v222
    %v349 = vpack.c.b16 %v225, %v223
    %v350 = vpack.c.b16 %v228, %v226
    %v351 = vpack.c.b16 %v229, %v227
    %v352 = vpack.c.b16 %v232, %v230
    %v353 = vpack.c.b16 %v233, %v231
    %v354 = vpack.c.b16 %v236, %v234
    %v355 = vpack.c.b16 %v237, %v235
    %v356 = vpack.c.b16 %v240, %v238
    %v357 = vpack.c.b16 %v241, %v239
    %v358 = vpack.c.b16 %v244, %v242
    %v359 = vpack.c.b16 %v245, %v243
    %v360 = vpack.c.b16 %v248, %v246
    %v361 = vpack.c.b16 %v249, %v247
    %v362 = vpack.c.b16 %v252, %v250
    %v363 = vpack.c.b16 %v253, %v251
    %v364 = vpack.c.b16 %v256, %v254
    %v365 = vpack.c.b16 %v257, %v255
    %v366 = vpack.c.b16 %v260, %v258
    %v367 = vpack.c.b16 %v261, %v259
    %v368 = vpack.c.b16 %v264, %v262
    %v369 = vpack.c.b16 %v265, %v263
    %v370 = vpack.c.b16 %v268, %v266
    %v371 = vpack.c.b16 %v269, %v267
    %v372 = vpack.c.b16 %v272, %v270
    %v373 = vpack.c.b16 %v273, %v271
    %v374 = vpack.c.b16 %v276, %v274
    %v375 = vpack.c.b16 %v277, %v275
    %v376 = vpack.c.b16 %v280, %v278
    %v377 = vpack.c.b16 %v281, %v279
    %v378 = vpack.c.b16 %v284, %v282
    %v379 = vpack.c.b16 %v285, %v283
    %v380 = vpack.c.b16 %v288, %v286
    %v381 = vpack.c.b16 %v289, %v287
    %v382 = vpack.c.b16 %v292, %v290
    %v383 = vpack.c.b16 %v293, %v291
    %v384 = vpack.c.b16 %v296, %v294
    %v385 = vpack.c.b16 %v297, %v295
    %v386 = vpack.c.b16 %v300, %v298
    %v387 = vpack.c.b16 %v301, %v299
    %v388 = vpack.c.b16 %v304, %v302
    %v389 = vpack.c.b16 %v305, %v303
    %v390 = vpack.c.b16 %v308, %v306
    %v391 = vpack.c.b16 %v309, %v307
    %v392 = vpack.c.b16 %v312, %v310
    %v393 = vpack.c.b16 %v313, %v311
    %v394 = vpack.c.b16 %v316, %v314
    %v395 = vpack.c.b16 %v317, %v315
    %v396 = vpack.c.b16 %v320, %v318
    %v397 = vpack.c.b16 %v321, %v319
    %v398 = vpack.c.b16 %v324, %v322
    %v399 = vpack.c.b16 %v325, %v323
    %v400 = vpack.c.b16 %v328, %v326
    %v401 = vpack.c.b16 %v329, %v327
    %v402 = vpack.c.b16 %v332, %v330
    %v403 = vpack.c.b16 %v333, %v331
    %v404 = vpack.c.b16 %v336, %v334
    %v405 = vpack.c.b16 %v337, %v335
    %v406 = vpack.c.b16 %v340, %v338
    %v407 = vpack.c.b16 %v341, %v339
    %v408 = vpack.c.b16 %v344, %v342
    %v409 = vpack.c.b16 %v345, %v343
    %474 = vmatprep.subr.bf16.mxu0 %v347
    %475 = vmatpush1.bf16.msra.mxu0 %v346
    %476 = vmatprep.subr.bf16.mxu0 %v349
    %477 = vmatpush1.bf16.msra.mxu0 %v348
    %478 = vmatprep.subr.bf16.mxu0 %v351
    %479 = vmatpush1.bf16.msra.mxu0 %v350
    %480 = vmatprep.subr.bf16.mxu0 %v353
    %481 = vmatpush1.bf16.msra.mxu0 %v352
    %482 = vmatprep.subr.bf16.mxu0 %v355
    %483 = vmatpush1.bf16.msra.mxu0 %v354
    %484 = vmatprep.subr.bf16.mxu0 %v357
    %485 = vmatpush1.bf16.msra.mxu0 %v356
    %486 = vmatprep.subr.bf16.mxu0 %v359
    %487 = vmatpush1.bf16.msra.mxu0 %v358
    %488 = vmatprep.subr.bf16.mxu0 %v361
    %489 = vmatpush1.bf16.msra.mxu0 %v360
    %490 = vmatprep.subr.bf16.mxu0 %v363
    %491 = vmatpush1.bf16.msra.mxu0 %v362
    %492 = vmatprep.subr.bf16.mxu0 %v365
    %493 = vmatpush1.bf16.msra.mxu0 %v364
    %494 = vmatprep.subr.bf16.mxu0 %v367
    %495 = vmatpush1.bf16.msra.mxu0 %v366
    %496 = vmatprep.subr.bf16.mxu0 %v369
    %497 = vmatpush1.bf16.msra.mxu0 %v368
    %498 = vmatprep.subr.bf16.mxu0 %v371
    %499 = vmatpush1.bf16.msra.mxu0 %v370
    %500 = vmatprep.subr.bf16.mxu0 %v373
    %501 = vmatpush1.bf16.msra.mxu0 %v372
    %502 = vmatprep.subr.bf16.mxu0 %v375
    %503 = vmatpush1.bf16.msra.mxu0 %v374
    %504 = vmatprep.subr.bf16.mxu0 %v377
    %505 = vmatpush1.bf16.msra.mxu0 %v376
    %506 = vmatprep.mubr.bf16.mxu0 %v147
    %507 = vmatmul.mubr.bf16.gmra.mrb[0].mxu0 %v146
    %v508 = vpop.f32.mrb[0].mxu0
    %v509 = vadd.f32 %v133, %v508
    %v510 = vpop.f32.mrb[0].mxu0
    %v511 = vadd.f32 %v137, %v510
    %v512 = vpop.f32.mrb[0].mxu0
    %v513 = vpop.f32.mrb[0].mxu0
    %514 = vdwg.mxu0
    %515 = vmatprep.subr.bf16.mxu0 %v379
    %516 = vmatpush1.bf16.msra.mxu0 %v378
    %517 = vmatprep.subr.bf16.mxu0 %v381
    %518 = vmatpush1.bf16.msra.mxu0 %v380
    %519 = vmatprep.subr.bf16.mxu0 %v383
    %520 = vmatpush1.bf16.msra.mxu0 %v382
    %521 = vmatprep.subr.bf16.mxu0 %v385
    %522 = vmatpush1.bf16.msra.mxu0 %v384
    %523 = vmatprep.subr.bf16.mxu0 %v387
    %524 = vmatpush1.bf16.msra.mxu0 %v386
    %525 = vmatprep.subr.bf16.mxu0 %v389
    %526 = vmatpush1.bf16.msra.mxu0 %v388
    %527 = vmatprep.subr.bf16.mxu0 %v391
    %528 = vmatpush1.bf16.msra.mxu0 %v390
    %529 = vmatprep.subr.bf16.mxu0 %v393
    %530 = vmatpush1.bf16.msra.mxu0 %v392
    %531 = vmatprep.subr.bf16.mxu0 %v395
    %532 = vmatpush1.bf16.msra.mxu0 %v394
    %533 = vmatprep.subr.bf16.mxu0 %v397
    %534 = vmatpush1.bf16.msra.mxu0 %v396
    %535 = vmatprep.subr.bf16.mxu0 %v399
    %536 = vmatpush1.bf16.msra.mxu0 %v398
    %537 = vmatprep.subr.bf16.mxu0 %v401
    %538 = vmatpush1.bf16.msra.mxu0 %v400
    %539 = vmatprep.subr.bf16.mxu0 %v403
    %540 = vmatpush1.bf16.msra.mxu0 %v402
    %541 = vmatprep.subr.bf16.mxu0 %v405
    %542 = vmatpush1.bf16.msra.mxu0 %v404
    %543 = vmatprep.subr.bf16.mxu0 %v407
    %544 = vmatpush1.bf16.msra.mxu0 %v406
    %545 = vmatprep.subr.bf16.mxu0 %v409
    %546 = vmatpush1.bf16.msra.mxu0 %v408
    %547 = vmatprep.mubr.bf16.mxu0 %v149
    %548 = vmatmul.mubr.bf16.gmra.mrb[0].mxu0 %v148
    %v549 = vpop.f32.mrb[0].mxu0
    %v550 = vadd.f32 %v509, %v549
    %v551 = vpop.f32.mrb[0].mxu0
    %v552 = vadd.f32 %v511, %v551
    %v553 = vpop.f32.mrb[0].mxu0
    %v554 = vpop.f32.mrb[0].mxu0
    %555 = vdwg.mxu0
    %vm556 = vcmp.gt.f32.partialorder %v550, 0.0
    %vm557 = vcmp.gt.f32.partialorder %v552, 0.0
    %v558 = vmul.f32 %v550, 0.2
    %v559 = vmul.f32 %v552, 0.2
    %v560 = vsel %vm556, %v550, %v558
    %v561 = vsel %vm557, %v552, %v559
    %v562 = vpack.c.bf16 %v560, %v560
    %v563 = vpack.c.bf16 %v561, %v561
    %v564 = vld [vmem:[#allocation5] sm:$0xf]
    %v565 = vld [vmem:[#allocation5 + $0x4] sm:$0xf]
    %v566 = vld [vmem:[#allocation5 + $0x8] sm:$0xf]
    %v567 = vld [vmem:[#allocation5 + $0xc] sm:$0xf]
    %v568 = vld [vmem:[#allocation5 + $0x10] sm:$0xf]
    %v569 = vld [vmem:[#allocation5 + $0x14] sm:$0xf]
    %v570 = vld [vmem:[#allocation5 + $0x18] sm:$0xf]
    %v571 = vld [vmem:[#allocation5 + $0x1c] sm:$0xf]
    %v572 = vld [vmem:[#allocation5 + $0x20] sm:$0xf]
    %v573 = vld [vmem:[#allocation5 + $0x24] sm:$0xf]
    %v574 = vld [vmem:[#allocation5 + $0x28] sm:$0xf]
    %v575 = vld [vmem:[#allocation5 + $0x2c] sm:$0xf]
    %v576 = vld [vmem:[#allocation5 + $0x30] sm:$0xf]
    %v577 = vld [vmem:[#allocation5 + $0x34] sm:$0xf]
    %v578 = vld [vmem:[#allocation5 + $0x38] sm:$0xf]
    %v579 = vld [vmem:[#allocation5 + $0x3c] sm:$0xf]
    %v580 = vld [vmem:[#allocation5 + $0x40] sm:$0xf]
    %v581 = vld [vmem:[#allocation5 + $0x44] sm:$0xf]
    %v582 = vld [vmem:[#allocation5 + $0x48] sm:$0xf]
    %v583 = vld [vmem:[#allocation5 + $0x4c] sm:$0xf]
    %v584 = vld [vmem:[#allocation5 + $0x50] sm:$0xf]
    %v585 = vld [vmem:[#allocation5 + $0x54] sm:$0xf]
    %v586 = vld [vmem:[#allocation5 + $0x58] sm:$0xf]
    %v587 = vld [vmem:[#allocation5 + $0x5c] sm:$0xf]
    %v588 = vld [vmem:[#allocation5 + $0x60] sm:$0xf]
    %v589 = vld [vmem:[#allocation5 + $0x64] sm:$0xf]
    %v590 = vld [vmem:[#allocation5 + $0x68] sm:$0xf]
    %v591 = vld [vmem:[#allocation5 + $0x6c] sm:$0xf]
    %v592 = vld [vmem:[#allocation5 + $0x70] sm:$0xf]
    %v593 = vld [vmem:[#allocation5 + $0x74] sm:$0xf]
    %v594 = vld [vmem:[#allocation5 + $0x78] sm:$0xf]
    %v595 = vld [vmem:[#allocation5 + $0x7c] sm:$0xf]
    %v596 = vld [vmem:[%s4] sm:$0x1]
    %v598 = vlaneseq
    %v599 = vshrl.u32 %v598, 7
    %v600 = vsub.s32 0, %v599
    %v601 = vrot.slane %v596, %v600
    %v635 = vunpack.c.l.b16 %v564
    %v636 = vunpack.c.l.b16 %v565
    %v637 = vunpack.c.l.b16 %v566
    %v638 = vunpack.c.l.b16 %v567
    %v639 = vunpack.c.l.b16 %v568
    %v640 = vunpack.c.l.b16 %v569
    %v641 = vunpack.c.l.b16 %v570
    %v642 = vunpack.c.l.b16 %v571
    %v643 = vunpack.c.l.b16 %v572
    %v644 = vunpack.c.l.b16 %v573
    %v645 = vunpack.c.l.b16 %v574
    %v646 = vunpack.c.l.b16 %v575
    %v647 = vunpack.c.l.b16 %v576
    %v648 = vunpack.c.l.b16 %v577
    %v649 = vunpack.c.l.b16 %v578
    %v650 = vunpack.c.l.b16 %v579
    %v651 = vunpack.c.l.b16 %v580
    %v652 = vunpack.c.l.b16 %v581
    %v653 = vunpack.c.l.b16 %v582
    %v654 = vunpack.c.l.b16 %v583
    %v655 = vunpack.c.l.b16 %v584
    %v656 = vunpack.c.l.b16 %v585
    %v657 = vunpack.c.l.b16 %v586
    %v658 = vunpack.c.l.b16 %v587
    %v659 = vunpack.c.l.b16 %v588
    %v660 = vunpack.c.l.b16 %v589
    %v661 = vunpack.c.l.b16 %v590
    %v662 = vunpack.c.l.b16 %v591
    %v663 = vunpack.c.l.b16 %v592
    %v664 = vunpack.c.l.b16 %v593
    %v665 = vunpack.c.l.b16 %v594
    %v666 = vunpack.c.l.b16 %v595
    %v667 = vpack.c.b16 %v636, %v635
    %v668 = vpack.c.b16 %v638, %v637
    %v669 = vpack.c.b16 %v640, %v639
    %v670 = vpack.c.b16 %v642, %v641
    %v671 = vpack.c.b16 %v644, %v643
    %v672 = vpack.c.b16 %v646, %v645
    %v673 = vpack.c.b16 %v648, %v647
    %v674 = vpack.c.b16 %v650, %v649
    %v675 = vpack.c.b16 %v652, %v651
    %v676 = vpack.c.b16 %v654, %v653
    %v677 = vpack.c.b16 %v656, %v655
    %v678 = vpack.c.b16 %v658, %v657
    %v679 = vpack.c.b16 %v660, %v659
    %v680 = vpack.c.b16 %v662, %v661
    %v681 = vpack.c.b16 %v664, %v663
    %v682 = vpack.c.b16 %v666, %v665
    %699 = vmatprep.subr.bf16.mxu0 0
    %700 = vmatpush1.bf16.msra.mxu0 %v667
    %701 = vmatprep.subr.bf16.mxu0 0
    %702 = vmatpush1.bf16.msra.mxu0 %v668
    %703 = vmatprep.subr.bf16.mxu0 0
    %704 = vmatpush1.bf16.msra.mxu0 %v669
    %705 = vmatprep.subr.bf16.mxu0 0
    %706 = vmatpush1.bf16.msra.mxu0 %v670
    %707 = vmatprep.subr.bf16.mxu0 0
    %708 = vmatpush1.bf16.msra.mxu0 %v671
    %709 = vmatprep.subr.bf16.mxu0 0
    %710 = vmatpush1.bf16.msra.mxu0 %v672
    %711 = vmatprep.subr.bf16.mxu0 0
    %712 = vmatpush1.bf16.msra.mxu0 %v673
    %713 = vmatprep.subr.bf16.mxu0 0
    %714 = vmatpush1.bf16.msra.mxu0 %v674
    %715 = vmatprep.subr.bf16.mxu0 0
    %716 = vmatpush1.bf16.msra.mxu0 %v675
    %717 = vmatprep.subr.bf16.mxu0 0
    %718 = vmatpush1.bf16.msra.mxu0 %v676
    %719 = vmatprep.subr.bf16.mxu0 0
    %720 = vmatpush1.bf16.msra.mxu0 %v677
    %721 = vmatprep.subr.bf16.mxu0 0
    %722 = vmatpush1.bf16.msra.mxu0 %v678
    %723 = vmatprep.subr.bf16.mxu0 0
    %724 = vmatpush1.bf16.msra.mxu0 %v679
    %725 = vmatprep.subr.bf16.mxu0 0
    %726 = vmatpush1.bf16.msra.mxu0 %v680
    %727 = vmatprep.subr.bf16.mxu0 0
    %728 = vmatpush1.bf16.msra.mxu0 %v681
    %729 = vmatprep.subr.bf16.mxu0 0
    %730 = vmatpush1.bf16.msra.mxu0 %v682
    %731 = vmatprep.mubr.bf16.mxu0 %v563
    %732 = vmatmul.mubr.bf16.gmra.mrb[0].mxu0 %v562
    %v733 = vpop.f32.mrb[0].mxu0
    %v734 = vadd.f32 %v601, %v733
    %v735 = vpop.f32.mrb[0].mxu0
    %v736 = vpop.f32.mrb[0].mxu0
    %v737 = vpop.f32.mrb[0].mxu0
    %738 = vdwg.mxu0
    %vm739 = vcmp.gt.f32.partialorder %v734, 0.0
    %v740 = vmul.f32 %v734, 0.2
    %v741 = vsel %vm739, %v734, %v740
    %v742 = vpack.c.bf16 %v741, %v741
    %v743 = vld [vmem:[%s5] sm:$0xf]
    %v744 = vld [vmem:[%s5 + $0x4] sm:$0xf]
    %v745 = vld [vmem:[%s5 + $0x8] sm:$0xf]
    %v746 = vld [vmem:[%s5 + $0xc] sm:$0xf]
    %v747 = vld [vmem:[%s5 + $0x10] sm:$0xf]
    %v748 = vld [vmem:[%s5 + $0x14] sm:$0xf]
    %v749 = vld [vmem:[%s5 + $0x18] sm:$0xf]
    %v750 = vld [vmem:[%s5 + $0x1c] sm:$0xf]
    %v751 = vld [vmem:[%s5 + $0x20] sm:$0xf]
    %v752 = vld [vmem:[%s5 + $0x24] sm:$0xf]
    %v753 = vld [vmem:[%s5 + $0x28] sm:$0xf]
    %v754 = vld [vmem:[%s5 + $0x2c] sm:$0xf]
    %v755 = vld [vmem:[%s5 + $0x30] sm:$0xf]
    %v756 = vld [vmem:[%s5 + $0x34] sm:$0xf]
    %v757 = vld [vmem:[%s5 + $0x38] sm:$0xf]
    %v758 = vld [vmem:[%s5 + $0x3c] sm:$0xf]
    %v759 = vld [vmem:[%s6] sm:$0x1]
    %v761 = vlaneseq
    %v762 = vshrl.u32 %v761, 7
    %v763 = vsub.s32 0, %v762
    %v764 = vrot.slane %v759, %v763
    %v782 = vunpack.c.l.b16 %v743
    %v783 = vunpack.c.l.b16 %v744
    %v784 = vunpack.c.l.b16 %v745
    %v785 = vunpack.c.l.b16 %v746
    %v786 = vunpack.c.l.b16 %v747
    %v787 = vunpack.c.l.b16 %v748
    %v788 = vunpack.c.l.b16 %v749
    %v789 = vunpack.c.l.b16 %v750
    %v790 = vunpack.c.l.b16 %v751
    %v791 = vunpack.c.l.b16 %v752
    %v792 = vunpack.c.l.b16 %v753
    %v793 = vunpack.c.l.b16 %v754
    %v794 = vunpack.c.l.b16 %v755
    %v795 = vunpack.c.l.b16 %v756
    %v796 = vunpack.c.l.b16 %v757
    %v797 = vunpack.c.l.b16 %v758
    %v798 = vpack.c.b16 %v783, %v782
    %v799 = vpack.c.b16 %v785, %v784
    %v800 = vpack.c.b16 %v787, %v786
    %v801 = vpack.c.b16 %v789, %v788
    %v802 = vpack.c.b16 %v791, %v790
    %v803 = vpack.c.b16 %v793, %v792
    %v804 = vpack.c.b16 %v795, %v794
    %v805 = vpack.c.b16 %v797, %v796
    %814 = vmatprep.subr.bf16.mxu0 0
    %815 = vmatpush1.bf16.msra.mxu0 %v798
    %816 = vmatprep.subr.bf16.mxu0 0
    %817 = vmatpush1.bf16.msra.mxu0 %v799
    %818 = vmatprep.subr.bf16.mxu0 0
    %819 = vmatpush1.bf16.msra.mxu0 %v800
    %820 = vmatprep.subr.bf16.mxu0 0
    %821 = vmatpush1.bf16.msra.mxu0 %v801
    %822 = vmatprep.subr.bf16.mxu0 0
    %823 = vmatpush1.bf16.msra.mxu0 %v802
    %824 = vmatprep.subr.bf16.mxu0 0
    %825 = vmatpush1.bf16.msra.mxu0 %v803
    %826 = vmatprep.subr.bf16.mxu0 0
    %827 = vmatpush1.bf16.msra.mxu0 %v804
    %828 = vmatprep.subr.bf16.mxu0 0
    %829 = vmatpush1.bf16.msra.mxu0 %v805
    %830 = vmatprep.subr.bf16.mxu0 0
    %831 = vmatpush1.bf16.msra.mxu0 0
    %832 = vmatprep.subr.bf16.mxu0 0
    %833 = vmatpush1.bf16.msra.mxu0 0
    %834 = vmatprep.subr.bf16.mxu0 0
    %835 = vmatpush1.bf16.msra.mxu0 0
    %836 = vmatprep.subr.bf16.mxu0 0
    %837 = vmatpush1.bf16.msra.mxu0 0
    %838 = vmatprep.subr.bf16.mxu0 0
    %839 = vmatpush1.bf16.msra.mxu0 0
    %840 = vmatprep.subr.bf16.mxu0 0
    %841 = vmatpush1.bf16.msra.mxu0 0
    %842 = vmatprep.subr.bf16.mxu0 0
    %843 = vmatpush1.bf16.msra.mxu0 0
    %844 = vmatprep.subr.bf16.mxu0 0
    %845 = vmatpush1.bf16.msra.mxu0 0
    %846 = vmatprep.mubr.bf16.mxu0 0
    %847 = vmatmul.mubr.bf16.gmra.mrb[0].mxu0 %v742
    %v848 = vpop.f32.mrb[0].mxu0
    %v849 = vadd.f32 %v764, %v848
    %v850 = vpop.f32.mrb[0].mxu0
    %v851 = vpop.f32.mrb[0].mxu0
    %v852 = vpop.f32.mrb[0].mxu0
    %853 = vdwg.mxu0
    %vm854 = vcmp.gt.f32.partialorder %v849, 0.0
    %v855 = vmul.f32 %v849, 0.2
    %v856 = vsel %vm854, %v849, %v855
    %v857 = vpack.c.bf16 %v856, %v856
    %v858 = vld [vmem:[%s7] sm:$0xf]
    %v859 = vld [vmem:[%s7 + $0x4] sm:$0xf]
    %v860 = vld [vmem:[%s7 + $0x8] sm:$0xf]
    %v861 = vld [vmem:[%s7 + $0xc] sm:$0xf]
    %v862 = vld [vmem:[%s7 + $0x10] sm:$0xf]
    %v863 = vld [vmem:[%s7 + $0x14] sm:$0xf]
    %v864 = vld [vmem:[%s7 + $0x18] sm:$0xf]
    %v865 = vld [vmem:[%s7 + $0x1c] sm:$0xf]
    %v866 = vld [vmem:[%s8] sm:$0x1]
    %v868 = vlaneseq
    %v869 = vshrl.u32 %v868, 7
    %v870 = vsub.s32 0, %v869
    %v871 = vrot.slane %v866, %v870
    %v881 = vunpack.c.l.b16 %v858
    %v882 = vunpack.c.l.b16 %v859
    %v883 = vunpack.c.l.b16 %v860
    %v884 = vunpack.c.l.b16 %v861
    %v885 = vunpack.c.l.b16 %v862
    %v886 = vunpack.c.l.b16 %v863
    %v887 = vunpack.c.l.b16 %v864
    %v888 = vunpack.c.l.b16 %v865
    %v889 = vpack.c.b16 %v882, %v881
    %v890 = vpack.c.b16 %v884, %v883
    %v891 = vpack.c.b16 %v886, %v885
    %v892 = vpack.c.b16 %v888, %v887
    %vm897 = vcmask 523264
    %v899 = vsel %vm897, %v857, 0
    %901 = vmatprep.subr.bf16.mxu0 0
    %902 = vmatpush1.bf16.msra.mxu0 %v889
    %903 = vmatprep.subr.bf16.mxu0 0
    %904 = vmatpush1.bf16.msra.mxu0 %v890
    %905 = vmatprep.subr.bf16.mxu0 0
    %906 = vmatpush1.bf16.msra.mxu0 %v891
    %907 = vmatprep.subr.bf16.mxu0 0
    %908 = vmatpush1.bf16.msra.mxu0 %v892
    %909 = vmatprep.subr.bf16.mxu0 0
    %910 = vmatpush1.bf16.msra.mxu0 0
    %911 = vmatprep.subr.bf16.mxu0 0
    %912 = vmatpush1.bf16.msra.mxu0 0
    %913 = vmatprep.subr.bf16.mxu0 0
    %914 = vmatpush1.bf16.msra.mxu0 0
    %915 = vmatprep.subr.bf16.mxu0 0
    %916 = vmatpush1.bf16.msra.mxu0 0
    %917 = vmatprep.subr.bf16.mxu0 0
    %918 = vmatpush1.bf16.msra.mxu0 0
    %919 = vmatprep.subr.bf16.mxu0 0
    %920 = vmatpush1.bf16.msra.mxu0 0
    %921 = vmatprep.subr.bf16.mxu0 0
    %922 = vmatpush1.bf16.msra.mxu0 0
    %923 = vmatprep.subr.bf16.mxu0 0
    %924 = vmatpush1.bf16.msra.mxu0 0
    %925 = vmatprep.subr.bf16.mxu0 0
    %926 = vmatpush1.bf16.msra.mxu0 0
    %927 = vmatprep.subr.bf16.mxu0 0
    %928 = vmatpush1.bf16.msra.mxu0 0
    %929 = vmatprep.subr.bf16.mxu0 0
    %930 = vmatpush1.bf16.msra.mxu0 0
    %931 = vmatprep.subr.bf16.mxu0 0
    %932 = vmatpush1.bf16.msra.mxu0 0
    %933 = vmatprep.mubr.bf16.mxu0 0
    %934 = vmatmul.mubr.bf16.gmra.mrb[0].mxu0 %v899
    %v935 = vpop.f32.mrb[0].mxu0
    %v936 = vadd.f32 %v871, %v935
    %v937 = vpop.f32.mrb[0].mxu0
    %v938 = vpop.f32.mrb[0].mxu0
    %v939 = vpop.f32.mrb[0].mxu0
    %940 = vdwg.mxu0
    %v941 = vlaneseq
    %v942 = vand.u32 %v941, 127
    %vm943 = vcmp.ge.s32.totalorder %v942, 1
    %vm944 = vcmp.le.s32.totalorder %v942, 5
    %vm945 = vmand %vm943, %vm944
    %v946 = vsel %vm945, %v936, -1e+30
    %947 = vmax.xlane.f32.xlu0 %v946
    %v948 = vpop.xlane.xlu0 %947
    %v949 = vsub.f32 %v946, %v948
    %v950 = vmul.f32 %v949, 1.442695
    %v951 = vpow.pop %v950
    %952 = vadd.xlane.f32.xlu0 %v951
    %v953 = vpop.xlane.xlu0 %952
    %v954 = vrcp.pop %v953
    %v955 = vmul.f32 %v951, %v954
    %v956 = vxor.u32 %v936, 2147483648
    %v957 = vmul.f32 %v956, 1.442695
    %v958 = vpow.pop %v957
    %v959 = vadd.f32 %v958, 1.0
    %v960 = vrcp.pop %v959
    %v961 = vmul.f32 1.0, %v960
    %vm962 = vcmp.eq.s32.totalorder %v942, 0
    %v963 = vsel %vm962, %v961, %v955
    %964 = vst [vmem:[#allocation7] sm:$0xff] %v963
    // Predicated region
    $region46: #{tpu_custom_call.1} parent=1 // pred_check
      _
    $region47: #{tpu_custom_call.1} parent=1 // pred_check_branch
      %966 = sbr.rel (0) target = $region49
    $region48: #{tpu_custom_call.1} parent=1 // pred_region
      %s968 = ssub.s32 128, 128
      %969 = vsyncadd [#allocation4], %s968
      %s971 = sshll.u32 [#allocation7], 4
      %s972 = int_to_ptr.vmem [resolvable:$true] %s971
      %974 = dma.vmem_to_hbm [thread:$0]  %s972, 128, %s9, [#allocation4]
    $region49: #{tpu_custom_call.1} parent=1 // pred_fallthru
      _
    // Predicated region
    $region50: #{tpu_custom_call.1} parent=1 // pred_check
      _
    $region51: #{tpu_custom_call.1} parent=1 // pred_check_branch
      %976 = sbr.rel (0) target = $region53
    $region52: #{tpu_custom_call.1} parent=1 // pred_region
      %977 = dma.done [#allocation4], 128
    $region53: #{tpu_custom_call.1} parent=1 // pred_fallthru
      _
    %978 = vsyncpa [#allocation3], 1
    %979 = vsyncpa [#allocation6], 1
    %980 = vsyncpa [#allocation4], 1

</llo_original>
